<compile_context>
chip_gen: v5e
topology: v5e:2x2
jax: 0.10.0
libtpu: 0.0.40
codegen_flags: <defaults>
</compile_context>

<pallas_src>
import functools

import jax
import jax.numpy as jnp
from jax.experimental import pallas as pl
from jax.experimental.pallas import tpu as pltpu


def _round_up(x, m):
    return ((x + m - 1) // m) * m


def _dual_tensorcore():
    """v7x has 2 TensorCores per chip; v5e/v6e have 1. Default to single."""
    try:
        kind = jax.devices()[0].device_kind.lower()
    except Exception:
        return False
    return ("v7" in kind) or ("tpu7" in kind)


# ----------------------------------------------------------------------------
# Fused Pallas kernel: one accumulated MXU matmul, all weights VMEM-resident.
#   out = patches @ W_p + noise @ W_n + b
# (exact fold of conv + squeeze Linear + to_rgb + ConvTranspose2d, valid while
#  MLPCBNMixer stays identity)
# ----------------------------------------------------------------------------
def _fused_mixer_kernel(p_ref, n_ref, wp_ref, wn_ref, b_ref, o_ref):
    acc = jnp.dot(p_ref[...], wp_ref[...], preferred_element_type=jnp.float32)
    acc = acc + jnp.dot(n_ref[...], wn_ref[...],
                        preferred_element_type=jnp.float32)
    o_ref[...] = (acc + b_ref[...]).astype(o_ref.dtype)


def fused_mixer_matmul(patches, noise_t, w_p, w_n, b, *, out_dtype=jnp.bfloat16):
    """patches: [M, Kp] bf16, noise_t: [M, Kn] bf16,
    w_p: [Kp, Nh] bf16, w_n: [Kn, Nh] bf16, b: [1, Nh] f32 -> [M, Nh] bf16."""
    M, Kp = patches.shape
    Mn, Kn = noise_t.shape
    assert M == Mn, (M, Mn)
    Kpw, Nh = w_p.shape
    Knw, Nh2 = w_n.shape
    assert Kp == Kpw and Kn == Knw and Nh == Nh2, (Kp, Kpw, Kn, Knw, Nh, Nh2)

    # bf16 packs 16 rows per vreg sublane-wise -> round row dim up to 16.
    Mp = _round_up(M, 16)
    if Mp != M:
        patches = jnp.pad(patches, ((0, Mp - M), (0, 0)))
        noise_t = jnp.pad(noise_t, ((0, Mp - M), (0, 0)))

    # Tile selection:
    #  * single grid step on single-TC chips (grid is a serial loop there),
    #  * >=2 row tiles on v7x so both TensorCores get work,
    #  * TM capped by VMEM budget (at TM=4096 the double-buffered activation
    #    + output tiles are ~3 MiB, well under every gen's scoped VMEM limit).
    TM_CAP = 4096
    if _dual_tensorcore() and Mp >= 16 and (Mp // 2) % 8 == 0:
        TM = Mp // 2
    else:
        TM = Mp
    while (TM > TM_CAP and TM % 2 == 0 and (TM // 2) % 8 == 0
           and Mp % (TM // 2) == 0):
        TM //= 2
    if Mp % TM != 0 or TM % 8 != 0:
        TM = Mp
    grid = (Mp // TM,)

    bytes_accessed = (Mp * (Kp + Kn) * 2                 # bf16 activations in
                      + (Kp + Kn) * Nh * 2 + Nh * 4      # resident weights/bias
                      + Mp * Nh * jnp.dtype(out_dtype).itemsize)  # output
    cost = pl.CostEstimate(flops=2 * Mp * (Kp + Kn) * Nh,
                           transcendentals=0,
                           bytes_accessed=bytes_accessed)

    out = pl.pallas_call(
        _fused_mixer_kernel,
        out_shape=jax.ShapeDtypeStruct((Mp, Nh), out_dtype),
        grid_spec=pltpu.PrefetchScalarGridSpec(
            num_scalar_prefetch=0,
            grid=grid,
            in_specs=[
                pl.BlockSpec((TM, Kp), lambda i: (i, 0)),   # patch activations
                pl.BlockSpec((TM, Kn), lambda i: (i, 0)),   # noise activations
                pl.BlockSpec((Kp, Nh), lambda i: (0, 0)),   # folded weight (resident)
                pl.BlockSpec((Kn, Nh), lambda i: (0, 0)),   # folded weight (resident)
                pl.BlockSpec((1, Nh), lambda i: (0, 0)),    # folded bias
            ],
            out_specs=pl.BlockSpec((TM, Nh), lambda i: (i, 0)),
        ),
        compiler_params=pltpu.CompilerParams(
            dimension_semantics=("parallel",)),
        cost_estimate=cost,
    )(patches, noise_t, w_p, w_n, b)
    return out[:M] if Mp != M else out


# ----------------------------------------------------------------------------
# Glue helpers (plain JAX: reshapes / gathers only)
# ----------------------------------------------------------------------------
def nearest_interpolate_nchw(x, out_hw):
    """PyTorch F.interpolate(mode='nearest'): src = floor(dst*in/out)."""
    B, C, H, W = x.shape
    Ho, Wo = out_hw
    ih = (jnp.arange(Ho) * H) // Ho
    iw = (jnp.arange(Wo) * W) // Wo
    return x[:, :, ih[:, None], iw[None, :]]


# ----------------------------------------------------------------------------
# Parameter construction (PyTorch module shapes)
# ----------------------------------------------------------------------------
def init_params(key, channel=32, patch_size=4, output_reduction=4):
    ks = jax.random.split(key, 8)
    c_out = channel // output_reduction
    scale = 0.02
    return dict(
        # nn.Conv2d(3, channel, (P, P), (P, P))
        conv_w=scale * jax.random.normal(ks[0], (channel, 3, patch_size, patch_size), jnp.float32),
        conv_b=scale * jax.random.normal(ks[1], (channel,), jnp.float32),
        # nn.Linear(channel*2, channel)
        squeeze_w=scale * jax.random.normal(ks[2], (channel, 2 * channel), jnp.float32),
        squeeze_b=scale * jax.random.normal(ks[3], (channel,), jnp.float32),
        # RGB_module.to_rgb = nn.Conv2d(channel, 3, 1, 1)
        rgb_w=scale * jax.random.normal(ks[4], (3, channel, 1, 1), jnp.float32),
        rgb_b=scale * jax.random.normal(ks[5], (3,), jnp.float32),
        # RGB_module.conv = nn.ConvTranspose2d(channel, channel//red, 2, 2)
        up_w=scale * jax.random.normal(ks[6], (channel, c_out, 2, 2), jnp.float32),
        up_b=scale * jax.random.normal(ks[7], (c_out,), jnp.float32),
    )


def prepare_fused_weights(params, channel, patch_size, output_reduction=4):
    """One-time, OFFLINE, f32 weight folding.

    Valid because MLPCBNMixer is identity (no nonlinearity between the
    patch-embed conv, the squeeze Linear, and the two output heads)."""
    C, P, Cin = channel, patch_size, 3
    c_out = C // output_reduction

    # Fold patch-embed conv into the squeeze Linear:
    #   squeeze(cat(conv(img), noise)) = patches @ (Wpe@Wl) + noise @ Wr + (b_pe@Wl + b_sq)
    w_pe = params["conv_w"].reshape(C, Cin * P * P).T            # [Cin*P*P, C]
    w_sq = params["squeeze_w"].T                                 # [2C, C]
    w_left, w_right = w_sq[:C], w_sq[C:]
    w_fold_p = w_pe @ w_left                                     # [Cin*P*P, C]
    w_fold_n = w_right                                           # [C, C]
    b_fold = params["conv_b"] @ w_left + params["squeeze_b"]     # [C]

    # Fused output heads, lane-dense 128-wide slab:
    #   columns [0:3]         -> to_rgb 1x1 conv
    #   columns [3:3+c_out*4] -> ConvTranspose2d(2,2), column order (co, kh, kw)
    w_rgb = params["rgb_w"].reshape(3, C).T                      # [C, 3]
    w_up = params["up_w"].reshape(C, c_out * 4)                  # [C, c_out*4]
    n_head = 3 + c_out * 4
    Nh = _round_up(max(n_head, 128), 128)
    w_head = jnp.zeros((C, Nh), jnp.float32)
    w_head = w_head.at[:, :3].set(w_rgb).at[:, 3:n_head].set(w_up)
    b_head = jnp.zeros((Nh,), jnp.float32)
    b_head = b_head.at[:3].set(params["rgb_b"])
    b_head = b_head.at[3:n_head].set(jnp.repeat(params["up_b"], 4))

    # Fold the two chained matmuls into ONE (exact, done at f32 offline):
    w_p = w_fold_p @ w_head                                      # [Cin*P*P, Nh]
    w_n = w_fold_n @ w_head                                      # [C, Nh]
    b_single = b_fold @ w_head + b_head                          # [Nh]

    return dict(
        w_p=w_p.astype(jnp.bfloat16),
        w_n=w_n.astype(jnp.bfloat16),
        b=b_single.reshape(1, Nh).astype(jnp.float32),
    )


# ----------------------------------------------------------------------------
# MLPMixerBlock.forward  (channel / patch_size / etc. are STATIC python args)
# ----------------------------------------------------------------------------
def mlp_mixer_block_forward(weights, img, noise, label, *, channel, patch_size,
                            output_reduction=4, output_resolution=(8, 16)):
    del label  # TODO(synk): MLPCBNMixer definition not provided in the source;
    # it is treated as identity (label unused).  All weight folds in
    # prepare_fused_weights are only valid while it stays so.
    B, Cin, H, W = img.shape
    P, C = patch_size, channel
    c_out = C // output_reduction
    h, w = H // P, W // P
    hw = h * w
    M = B * hw

    # im2col for the patch-embed conv (kernel == stride == P) and noise
    # transpose -- passed to the kernel as TWO inputs (no HBM concat).
    patches = (
        img.reshape(B, Cin, h, P, w, P)
        .transpose(0, 2, 4, 1, 3, 5)                 # [B, h, w, Cin, P, P]
        .reshape(M, Cin * P * P)
    ).astype(jnp.bfloat16)
    noise_t = jnp.transpose(noise, (0, 2, 1)).reshape(M, C).astype(jnp.bfloat16)

    # Single fused Pallas kernel (one accumulated matmul + bias).
    out = fused_mixer_matmul(patches, noise_t, weights["w_p"], weights["w_n"],
                             weights["b"])           # [M, 128] bf16

    # to_rgb head -> NCHW + nearest interpolation (f32 module output).
    rgb = out[:, :3].astype(jnp.float32).reshape(B, h, w, 3).transpose(0, 3, 1, 2)
    rgb = nearest_interpolate_nchw(rgb, output_resolution)       # [B, 3, Ho, Wo]

    # up-conv head -> pixel shuffle (ConvTranspose2d with kernel=stride=2).
    y = out[:, 3:3 + c_out * 4].astype(jnp.float32)
    y = (
        y.reshape(B, h, w, c_out, 2, 2)
        .transpose(0, 3, 1, 4, 2, 5)                 # [B, c_out, h, 2, w, 2]
        .reshape(B, c_out, 2 * h, 2 * w)
    )
    return y, rgb


if __name__ == "__main__":
    key = jax.random.PRNGKey(0)
    k_params, k_img, k_noise = jax.random.split(key, 3)

    channel = 32
    patch_size = 4
    output_reduction = 4
    B, H, W = 2, 16, 16
    h, w = H // patch_size, W // patch_size          # 4, 4
    hw = h * w                                        # 16

    params = init_params(k_params, channel=channel, patch_size=patch_size,
                         output_reduction=output_reduction)
    weights = prepare_fused_weights(params, channel, patch_size, output_reduction)

    img = jax.random.normal(k_img, (B, 3, H, W), jnp.float32)
    noise = jax.random.normal(k_noise, (B, channel, hw), jnp.float32)
    label = jnp.zeros((B,), jnp.int32)               # unused (mixer is TODO identity)

    fwd = jax.jit(functools.partial(
        mlp_mixer_block_forward,
        channel=channel, patch_size=patch_size,
        output_reduction=output_reduction, output_resolution=(8, 16)))

    x_out, rgb_out = fwd(weights, img, noise, label)
    jax.block_until_ready((x_out, rgb_out))

    assert x_out.shape == (B, channel // output_reduction, 2 * h, 2 * w), x_out.shape
    assert rgb_out.shape == (B, 3, 8, 16), rgb_out.shape
    print("KERNEL_OK")
</pallas_src>

<mosaic_0001>
module attributes {stable_mosaic.version = 11 : i64} {
  func.func @_fused_mixer_kernel(%arg0: i32, %arg1: memref<32x48xbf16, #tpu.memory_space<vmem>>, %arg2: memref<32x32xbf16, #tpu.memory_space<vmem>>, %arg3: memref<48x128xbf16, #tpu.memory_space<vmem>>, %arg4: memref<32x128xbf16, #tpu.memory_space<vmem>>, %arg5: memref<1x128xf32, #tpu.memory_space<vmem>>, %arg6: memref<32x128xbf16, #tpu.memory_space<vmem>>) attributes {dimension_semantics = [#tpu.dimension_semantics<parallel>], iteration_bounds = array<i64: 1>, scalar_prefetch = 0 : i64, scratch_operands = 0 : i64, tpu.core_type = #tpu.core_type<tc>, window_params = [{transform_indices = @transform_0, window_bounds = array<i64: 32, 48>}, {transform_indices = @transform_1, window_bounds = array<i64: 32, 32>}, {pipeline_mode = #tpu.pipeline_mode<synchronous>, transform_indices = @transform_2, window_bounds = array<i64: 48, 128>}, {pipeline_mode = #tpu.pipeline_mode<synchronous>, transform_indices = @transform_3, window_bounds = array<i64: 32, 128>}, {pipeline_mode = #tpu.pipeline_mode<synchronous>, transform_indices = @transform_4, window_bounds = array<i64: 1, 128>}, {transform_indices = @transform_5, window_bounds = array<i64: 32, 128>}]} {
    %c0 = arith.constant 0 : index
    %c0_0 = arith.constant 0 : index
    %0 = vector.load %arg1[%c0, %c0_0] : memref<32x48xbf16, #tpu.memory_space<vmem>>, vector<32x48xbf16>
    %c0_1 = arith.constant 0 : index
    %c0_2 = arith.constant 0 : index
    %1 = vector.load %arg3[%c0_1, %c0_2] : memref<48x128xbf16, #tpu.memory_space<vmem>>, vector<48x128xbf16>
    %cst = arith.constant dense<0.000000e+00> : vector<32x128xf32>
    %2 = tpu.matmul %0, %1, %cst {dimension_numbers = #tpu.dot_dimension_numbers<[1], [0], [0], [1], [0, 0, 1, 1], [], []>} : vector<32x48xbf16>, vector<48x128xbf16>, vector<32x128xf32> -> vector<32x128xf32>
    %c0_3 = arith.constant 0 : index
    %c0_4 = arith.constant 0 : index
    %3 = vector.load %arg2[%c0_3, %c0_4] : memref<32x32xbf16, #tpu.memory_space<vmem>>, vector<32x32xbf16>
    %c0_5 = arith.constant 0 : index
    %c0_6 = arith.constant 0 : index
    %4 = vector.load %arg4[%c0_5, %c0_6] : memref<32x128xbf16, #tpu.memory_space<vmem>>, vector<32x128xbf16>
    %cst_7 = arith.constant dense<0.000000e+00> : vector<32x128xf32>
    %5 = tpu.matmul %3, %4, %cst_7 {dimension_numbers = #tpu.dot_dimension_numbers<[1], [0], [0], [1], [0, 0, 1, 1], [], []>} : vector<32x32xbf16>, vector<32x128xbf16>, vector<32x128xf32> -> vector<32x128xf32>
    %6 = arith.addf %2, %5 : vector<32x128xf32>
    %c0_8 = arith.constant 0 : index
    %c0_9 = arith.constant 0 : index
    %7 = vector.load %arg5[%c0_8, %c0_9] : memref<1x128xf32, #tpu.memory_space<vmem>>, vector<1x128xf32>
    %8 = vector.broadcast %7 : vector<1x128xf32> to vector<32x128xf32>
    %9 = arith.addf %6, %8 : vector<32x128xf32>
    %10 = arith.truncf %9 : vector<32x128xf32> to vector<32x128xbf16>
    %c0_10 = arith.constant 0 : index
    %c0_11 = arith.constant 0 : index
    %11 = vector.load %arg6[%c0_10, %c0_11] : memref<32x128xbf16, #tpu.memory_space<vmem>>, vector<32x128xbf16>
    tpu.vector_store %arg6[%c0_10, %c0_11], %10 {strides = array<i32>} : memref<32x128xbf16, #tpu.memory_space<vmem>>, vector<32x128xbf16>,
    return
  }
  func.func @transform_0(%arg0: i32) -> (i32, i32) {
    %c0_i32 = arith.constant 0 : i32
    %c0_i32_0 = arith.constant 0 : i32
    return %arg0, %c0_i32 : i32, i32
  }
  func.func @transform_1(%arg0: i32) -> (i32, i32) {
    %c0_i32 = arith.constant 0 : i32
    %c0_i32_0 = arith.constant 0 : i32
    return %arg0, %c0_i32 : i32, i32
  }
  func.func @transform_2(%arg0: i32) -> (i32, i32) {
    %c0_i32 = arith.constant 0 : i32
    %c0_i32_0 = arith.constant 0 : i32
    %c0_i32_1 = arith.constant 0 : i32
    return %c0_i32, %c0_i32_0 : i32, i32
  }
  func.func @transform_3(%arg0: i32) -> (i32, i32) {
    %c0_i32 = arith.constant 0 : i32
    %c0_i32_0 = arith.constant 0 : i32
    %c0_i32_1 = arith.constant 0 : i32
    return %c0_i32, %c0_i32_0 : i32, i32
  }
  func.func @transform_4(%arg0: i32) -> (i32, i32) {
    %c0_i32 = arith.constant 0 : i32
    %c0_i32_0 = arith.constant 0 : i32
    %c0_i32_1 = arith.constant 0 : i32
    return %c0_i32, %c0_i32_0 : i32, i32
  }
  func.func @transform_5(%arg0: i32) -> (i32, i32) {
    %c0_i32 = arith.constant 0 : i32
    %c0_i32_0 = arith.constant 0 : i32
    return %arg0, %c0_i32 : i32, i32
  }
}

</mosaic_0001>

<llo_original>
// kernel: mlp_mixer_block_forward.1
$region0: #{mlp_mixer_block_forward.1}
  #allocation0 [shape = 'u32[]', space=smem, size = 0x4, offset = 0x4, fixed_abs, tag = 'smem constant byte address 0x4 - core index']
  #allocation1 [shape = 'u32[72,128]{1,0:T(1,128)}', space=vmem, size = 0x9000, scoped, tag = 'internal scratch']
  %s0 = inlined_call_operand.vmem [shape: bf16[32,48], index: 0, kind: input, shape index: {}]
  %s1 = inlined_call_operand.vmem [shape: bf16[32,32], index: 1, kind: input, shape index: {}]
  %s2 = inlined_call_operand.vmem [shape: bf16[48,128], index: 2, kind: input, shape index: {}]
  %s3 = inlined_call_operand.vmem [shape: bf16[32,128], index: 3, kind: input, shape index: {}]
  %s4 = inlined_call_operand.vmem [shape: f32[1,128], index: 4, kind: input, shape index: {}]
  %s5 = inlined_call_operand.vmem [shape: bf16[32,128], index: 5, kind: output, shape index: {}]
  %s6 = sld [smem:[#allocation0]]
  $region30: #{mlp_mixer_block_forward.1} parent=0
    _
  %s8 = ssub.s32 1, %s6
  %s9 = scalar_select 0, %s8, %s6
  // Predicated region
  $region2: #{mlp_mixer_block_forward.1} parent=0 // pred_check
    _
  $region3: #{mlp_mixer_block_forward.1} parent=0 // pred_check_branch
    %11 = sbr.rel (0) target = $region5
  $region4: #{mlp_mixer_block_forward.1} parent=0 // pred_region
    _
  $region5: #{mlp_mixer_block_forward.1} parent=0 // pred_fallthru
    _
  // Predicated region
  $region6: #{mlp_mixer_block_forward.1} parent=0 // pred_check
    _
  $region7: #{mlp_mixer_block_forward.1} parent=0 // pred_check_branch
    %13 = sbr.rel (0) target = $region9
  $region8: #{mlp_mixer_block_forward.1} parent=0 // pred_region
    _
  $region9: #{mlp_mixer_block_forward.1} parent=0 // pred_fallthru
    _
  // Predicated region
  $region10: #{mlp_mixer_block_forward.1} parent=0 // pred_check
    _
  $region11: #{mlp_mixer_block_forward.1} parent=0 // pred_check_branch
    %15 = sbr.rel (0) target = $region13
  $region12: #{mlp_mixer_block_forward.1} parent=0 // pred_region
    _
  $region13: #{mlp_mixer_block_forward.1} parent=0 // pred_fallthru
    _
  // Predicated region
  $region14: #{mlp_mixer_block_forward.1} parent=0 // pred_check
    _
  $region15: #{mlp_mixer_block_forward.1} parent=0 // pred_check_branch
    %17 = sbr.rel (0) target = $region17
  $region16: #{mlp_mixer_block_forward.1} parent=0 // pred_region
    _
  $region17: #{mlp_mixer_block_forward.1} parent=0 // pred_fallthru
    _
  // Predicated region
  $region18: #{mlp_mixer_block_forward.1} parent=0 // pred_check
    _
  $region19: #{mlp_mixer_block_forward.1} parent=0 // pred_check_branch
    %19 = sbr.rel (0) target = $region21
  $region20: #{mlp_mixer_block_forward.1} parent=0 // pred_region
    _
  $region21: #{mlp_mixer_block_forward.1} parent=0 // pred_fallthru
    _
  %v21 = vld [vmem:[%s0] sm:$0xf]
  %v22 = vld [vmem:[%s0 + $0x4] sm:$0xf]
  %v23 = vld [vmem:[%s0 + $0x8] sm:$0xf]
  %v24 = vld [vmem:[%s0 + $0xc] sm:$0xf]
  %v25 = vld [vmem:[%s2] sm:$0xf]
  %v26 = vld [vmem:[%s2 + $0x4] sm:$0xf]
  %v27 = vld [vmem:[%s2 + $0x8] sm:$0xf]
  %v28 = vld [vmem:[%s2 + $0xc] sm:$0xf]
  %v29 = vld [vmem:[%s2 + $0x10] sm:$0xf]
  %v30 = vld [vmem:[%s2 + $0x14] sm:$0xf]
  %v31 = vld [vmem:[%s1] sm:$0xf]
  %v32 = vld [vmem:[%s1 + $0x4] sm:$0xf]
  %v33 = vld [vmem:[%s1 + $0x8] sm:$0xf]
  %v34 = vld [vmem:[%s1 + $0xc] sm:$0xf]
  %v35 = vld [vmem:[%s3] sm:$0xf]
  %v36 = vld [vmem:[%s3 + $0x4] sm:$0xf]
  %v37 = vld [vmem:[%s3 + $0x8] sm:$0xf]
  %v38 = vld [vmem:[%s3 + $0xc] sm:$0xf]
  %v43 = vunpack.c.l.b16 %v31
  %v44 = vunpack.c.l.b16 %v32
  %v45 = vunpack.c.l.b16 %v33
  %v46 = vunpack.c.l.b16 %v34
  %v47 = vpack.c.b16 %v44, %v43
  %v48 = vpack.c.b16 %v46, %v45
  %v53 = vunpack.c.l.b16 %v35
  %v54 = vunpack.c.l.b16 %v36
  %v55 = vunpack.c.l.b16 %v37
  %v56 = vunpack.c.l.b16 %v38
  %v57 = vpack.c.b16 %v54, %v53
  %v58 = vpack.c.b16 %v56, %v55
  %vm61 = vcmask 261120
  %v63 = vsel %vm61, %v47, 0
  %v66 = vsel %vm61, %v48, 0
  %68 = vmatpush.bf16.msra.mxu0 0
  %69 = vmatpush.bf16.msra.mxu0 0
  %70 = vmatpush.bf16.msra.mxu0 0
  %71 = vmatpush.bf16.msra.mxu0 0
  %72 = vmatpush.bf16.msra.mxu0 0
  %73 = vmatpush.bf16.msra.mxu0 0
  %74 = vmatpush.bf16.msra.mxu0 %v58
  %75 = vmatpush.bf16.msra.mxu0 %v57
  %76 = vmatmul.bf16.gmra.mxu0 %v63
  %v77 = vpop.f32.mrf.mxu0
  %v78 = vadd.f32 0.0, %v77
  %v79 = vpop.f32.mrf.mxu0
  %v80 = vadd.f32 0.0, %v79
  %81 = vmatmul.bf16.gmra.mxu0 %v66
  %v82 = vpop.f32.mrf.mxu0
  %v83 = vadd.f32 0.0, %v82
  %v84 = vpop.f32.mrf.mxu0
  %v85 = vadd.f32 0.0, %v84
  %86 = vdwg.mxu0
  %v91 = vunpack.c.l.b16 %v21
  %v92 = vunpack.c.l.b16 %v22
  %v93 = vunpack.c.l.b16 %v23
  %v94 = vunpack.c.l.b16 %v24
  %v95 = vpack.c.b16 %v92, %v91
  %v96 = vpack.c.b16 %v94, %v93
  %v103 = vunpack.c.l.b16 %v25
  %v104 = vunpack.c.l.b16 %v26
  %v105 = vunpack.c.l.b16 %v27
  %v106 = vunpack.c.l.b16 %v28
  %v107 = vunpack.c.l.b16 %v29
  %v108 = vunpack.c.l.b16 %v30
  %v109 = vpack.c.b16 %v104, %v103
  %v110 = vpack.c.b16 %v106, %v105
  %v111 = vpack.c.b16 %v108, %v107
  %vm115 = vcmask 392192
  %v117 = vsel %vm115, %v95, 0
  %v120 = vsel %vm115, %v96, 0
  %122 = vmatpush.bf16.msra.mxu0 0
  %123 = vmatpush.bf16.msra.mxu0 0
  %124 = vmatpush.bf16.msra.mxu0 0
  %125 = vmatpush.bf16.msra.mxu0 0
  %126 = vmatpush.bf16.msra.mxu0 0
  %127 = vmatpush.bf16.msra.mxu0 %v111
  %128 = vmatpush.bf16.msra.mxu0 %v110
  %129 = vmatpush.bf16.msra.mxu0 %v109
  %130 = vmatmul.bf16.gmra.mxu0 %v117
  %v131 = vpop.f32.mrf.mxu0
  %v132 = vadd.f32 %v78, %v131
  %v133 = vpop.f32.mrf.mxu0
  %v134 = vadd.f32 %v80, %v133
  %135 = vmatmul.bf16.gmra.mxu0 %v120
  %v136 = vpop.f32.mrf.mxu0
  %v137 = vadd.f32 %v83, %v136
  %v138 = vpop.f32.mrf.mxu0
  %v139 = vadd.f32 %v85, %v138
  %140 = vdwg.mxu0
  %v141 = vld [vmem:[%s4] sm:$0x1]
  %v143 = vperm.slane %v141, 0
  %v145 = vadd.f32 %v132, %v143
  %v146 = vadd.f32 %v134, %v143
  %v147 = vadd.f32 %v137, %v143
  %v148 = vadd.f32 %v139, %v143
  %v149 = vpack.c.bf16 %v145, %v145
  %v150 = vpack.c.bf16 %v146, %v146
  %v151 = vpack.c.bf16 %v147, %v147
  %v152 = vpack.c.bf16 %v148, %v148
  %153 = vst [vmem:[%s5] sm:$0xf] %v149
  %154 = vst [vmem:[%s5 + $0x4] sm:$0xf] %v150
  %155 = vst [vmem:[%s5 + $0x8] sm:$0xf] %v151
  %156 = vst [vmem:[%s5 + $0xc] sm:$0xf] %v152
  // Predicated region
  $region22: #{mlp_mixer_block_forward.1} parent=0 // pred_check
    _
  $region23: #{mlp_mixer_block_forward.1} parent=0 // pred_check_branch
    %158 = sbr.rel (0) target = $region25
  $region24: #{mlp_mixer_block_forward.1} parent=0 // pred_region
    _
  $region25: #{mlp_mixer_block_forward.1} parent=0 // pred_fallthru
    _
  // Predicated region
  $region26: #{mlp_mixer_block_forward.1} parent=0 // pred_check
    _
  $region27: #{mlp_mixer_block_forward.1} parent=0 // pred_check_branch
    %160 = sbr.rel (0) target = $region29
  $region28: #{mlp_mixer_block_forward.1} parent=0 // pred_region
    _
  $region29: #{mlp_mixer_block_forward.1} parent=0 // pred_fallthru
    _

</llo_original>
